<compile_context>
chip_gen: v7x
topology: tpu7x:2x2x1
jax: 0.10.0
libtpu: 0.0.40
codegen_flags: <defaults>
</compile_context>

<pallas_src>
import jax
import jax.numpy as jnp
from jax.experimental import pallas as pl
from jax.experimental.pallas import tpu as pltpu

_OUT_PAD = 8   # padded logit rows (real logits are the first 2)
_IN = 64
_HID = 32
_NCLS = 2


def _discriminator_kernel(x_ref, w1_ref, b1_ref, w2t_ref, b2t_ref, o_ref):
    # Layer 1: (TM, 64) @ (64, 32) -> (TM, 32), f32 MXU accumulate, bias + ReLU.
    h = jnp.dot(x_ref[...], w1_ref[...], preferred_element_type=jnp.float32)
    h = jnp.maximum(h + b1_ref[...], 0.0)
    # Layer 2, batch-on-lane: (8, 32) . (TM, 32)^T -> (8, TM).  Lane dim = TM,
    # so the writeback is a lane-dense unmasked store of only 8 f32 rows.
    out_t = jax.lax.dot_general(
        w2t_ref[...], h,
        dimension_numbers=(((1,), (1,)), ((), ())),   # contract both on dim 1
        preferred_element_type=jnp.float32,
    )
    o_ref[...] = (out_t + b2t_ref[...]).astype(o_ref.dtype)


def _round_up(n, m):
    return ((n + m - 1) // m) * m


def _choose_tile(B, tm):
    """Pick the batch tile TM.

    * Small batches: one block whose dims equal the array dims (no (8,128)
      divisibility requirement in that case).
    * Large batches: a multiple of 128 (lane dim of the transposed output),
      capped so the grid has >= 2 blocks — v7x's two TensorCores only split
      the "parallel" axis if there is more than one block.
    """
    if B <= 256:
        return B
    tile = min(tm, _round_up(pl.cdiv(B, 2), 128))
    return max(128, (tile // 128) * 128)


def discriminator_forward(x, w1, b1, w2, b2, *, tm=4096):
    """Full MLP forward in one Pallas kernel, batch-tiled over a 1-D grid.

    x : (B, 64) f32    w1: (64, 32)   b1: (1, 32)
    w2: (32, 2)        b2: (1, 2)
    Returns (B, 2) f32 logits (matches nn.Linear(64,32)+ReLU+nn.Linear(32,2)).
    """
    B = x.shape[0]
    TM = _choose_tile(B, tm)
    grid = (pl.cdiv(B, TM),)

    # Pre-transpose + zero-pad the tiny output projection (one-time, ~1 KiB).
    w2t = jnp.zeros((_OUT_PAD, _HID), jnp.float32).at[:_NCLS, :].set(w2.T)
    b2t = jnp.zeros((_OUT_PAD, 1), jnp.float32).at[:_NCLS, :].set(b2.T)

    cost = pl.CostEstimate(
        flops=2 * B * _IN * _HID + 2 * B * _HID * _OUT_PAD,
        transcendentals=0,
        bytes_accessed=(B * _IN * 4 + _OUT_PAD * B * 4
                        + (_IN * _HID + _HID + _OUT_PAD * _HID + _OUT_PAD) * 4),
    )

    out_t = pl.pallas_call(
        _discriminator_kernel,
        out_shape=jax.ShapeDtypeStruct((_OUT_PAD, B), jnp.float32),
        grid=grid,
        in_specs=[
            pl.BlockSpec((TM, _IN), lambda i: (i, 0)),          # x tile (streamed f32)
            pl.BlockSpec((_IN, _HID), lambda i: (0, 0)),        # w1 (resident)
            pl.BlockSpec((1, _HID), lambda i: (0, 0)),          # b1 (resident)
            pl.BlockSpec((_OUT_PAD, _HID), lambda i: (0, 0)),   # w2^T padded (resident)
            pl.BlockSpec((_OUT_PAD, 1), lambda i: (0, 0)),      # b2^T padded (resident)
        ],
        out_specs=pl.BlockSpec((_OUT_PAD, TM), lambda i: (0, i)),
        compiler_params=pltpu.CompilerParams(
            dimension_semantics=("parallel",),
        ),
        cost_estimate=cost,
    )(x, w1, b1, w2t, b2t)

    # (8, B) -> (B, 2): read 2 contiguous rows, tiny transpose.
    return out_t[:_NCLS, :].T


def init_params(key):
    """Deterministic parameter init matching nn.Linear shapes.

    PyTorch: layer[0] = Linear(64, 32) -> weight (32, 64), bias (32,)
             layer[2] = Linear(32, 2)  -> weight (2, 32),  bias (2,)
    Stored here as (in, out) so the kernel computes x @ W + b directly.
    """
    k1, k2, k3, k4 = jax.random.split(key, 4)
    lim1 = 1.0 / jnp.sqrt(64.0)
    lim2 = 1.0 / jnp.sqrt(32.0)
    w1 = jax.random.uniform(k1, (_IN, _HID), jnp.float32, -lim1, lim1)
    b1 = jax.random.uniform(k2, (1, _HID), jnp.float32, -lim1, lim1)
    w2 = jax.random.uniform(k3, (_HID, _NCLS), jnp.float32, -lim2, lim2)
    b2 = jax.random.uniform(k4, (1, _NCLS), jnp.float32, -lim2, lim2)
    return w1, b1, w2, b2


if __name__ == "__main__":
    key = jax.random.PRNGKey(0)
    kx, kp = jax.random.split(key)
    w1, b1, w2, b2 = init_params(kp)

    def ref(xv):
        return jnp.maximum(xv @ w1 + b1, 0.0) @ w2 + b2

    # Small single-block case (block dims == array dims).
    x_small = jax.random.normal(kx, (8, _IN), jnp.float32)
    out_small = jax.block_until_ready(discriminator_forward(x_small, w1, b1, w2, b2))
    assert out_small.shape == (8, _NCLS), out_small.shape
    # Tolerance covers MXU f32-pass rounding only (data path is f32 throughout).
    assert jnp.allclose(out_small, ref(x_small), atol=2e-2, rtol=2e-2), \
        "mismatch vs f32 reference (small batch)"

    # Multi-block case with a partial final tile (exercises grid + masking).
    x_big = jax.random.normal(kx, (520, _IN), jnp.float32)
    out_big = jax.block_until_ready(
        discriminator_forward(x_big, w1, b1, w2, b2, tm=256))
    assert out_big.shape == (520, _NCLS), out_big.shape
    assert jnp.allclose(out_big, ref(x_big), atol=2e-2, rtol=2e-2), \
        "mismatch vs f32 reference (tiled batch)"

    print("KERNEL_OK")
</pallas_src>

<mosaic_0001>
module attributes {stable_mosaic.version = 11 : i64} {
  func.func @_discriminator_kernel(%arg0: i32, %arg1: memref<8x64xf32, #tpu.memory_space<vmem>>, %arg2: memref<64x32xf32, #tpu.memory_space<vmem>>, %arg3: memref<1x32xf32, #tpu.memory_space<vmem>>, %arg4: memref<8x32xf32, #tpu.memory_space<vmem>>, %arg5: memref<8x1xf32, #tpu.memory_space<vmem>>, %arg6: memref<8x8xf32, #tpu.memory_space<vmem>>) attributes {dimension_semantics = [#tpu.dimension_semantics<parallel>], iteration_bounds = array<i64: 1>, scalar_prefetch = 0 : i64, scratch_operands = 0 : i64, tpu.core_type = #tpu.core_type<tc>, window_params = [{transform_indices = @transform_0, window_bounds = array<i64: 8, 64>}, {pipeline_mode = #tpu.pipeline_mode<synchronous>, transform_indices = @transform_1, window_bounds = array<i64: 64, 32>}, {pipeline_mode = #tpu.pipeline_mode<synchronous>, transform_indices = @transform_2, window_bounds = array<i64: 1, 32>}, {pipeline_mode = #tpu.pipeline_mode<synchronous>, transform_indices = @transform_3, window_bounds = array<i64: 8, 32>}, {pipeline_mode = #tpu.pipeline_mode<synchronous>, transform_indices = @transform_4, window_bounds = array<i64: 8, 1>}, {transform_indices = @transform_5, window_bounds = array<i64: 8, 8>}]} {
    %c0 = arith.constant 0 : index
    %c0_0 = arith.constant 0 : index
    %0 = vector.load %arg1[%c0, %c0_0] : memref<8x64xf32, #tpu.memory_space<vmem>>, vector<8x64xf32>
    %c0_1 = arith.constant 0 : index
    %c0_2 = arith.constant 0 : index
    %1 = vector.load %arg2[%c0_1, %c0_2] : memref<64x32xf32, #tpu.memory_space<vmem>>, vector<64x32xf32>
    %cst = arith.constant dense<0.000000e+00> : vector<8x32xf32>
    %2 = tpu.matmul %0, %1, %cst {dimension_numbers = #tpu.dot_dimension_numbers<[1], [0], [0], [1], [0, 0, 1, 1], [], []>} : vector<8x64xf32>, vector<64x32xf32>, vector<8x32xf32> -> vector<8x32xf32>
    %c0_3 = arith.constant 0 : index
    %c0_4 = arith.constant 0 : index
    %3 = vector.load %arg3[%c0_3, %c0_4] : memref<1x32xf32, #tpu.memory_space<vmem>>, vector<1x32xf32>
    %4 = vector.broadcast %3 : vector<1x32xf32> to vector<8x32xf32>
    %5 = arith.addf %2, %4 : vector<8x32xf32>
    %cst_5 = arith.constant 0.000000e+00 : f32
    %6 = vector.broadcast %cst_5 : f32 to vector<8x32xf32>
    %7 = arith.maximumf %5, %6 : vector<8x32xf32>
    %c0_6 = arith.constant 0 : index
    %c0_7 = arith.constant 0 : index
    %8 = vector.load %arg4[%c0_6, %c0_7] : memref<8x32xf32, #tpu.memory_space<vmem>>, vector<8x32xf32>
    %cst_8 = arith.constant dense<0.000000e+00> : vector<8x8xf32>
    %9 = tpu.matmul %8, %7, %cst_8 {dimension_numbers = #tpu.dot_dimension_numbers<[1], [1], [0], [0], [0, 0, 1, 0], [], []>} : vector<8x32xf32>, vector<8x32xf32>, vector<8x8xf32> -> vector<8x8xf32>
    %c0_9 = arith.constant 0 : index
    %c0_10 = arith.constant 0 : index
    %10 = vector.load %arg5[%c0_9, %c0_10] : memref<8x1xf32, #tpu.memory_space<vmem>>, vector<8x1xf32>
    %11 = vector.broadcast %10 : vector<8x1xf32> to vector<8x8xf32>
    %12 = arith.addf %9, %11 : vector<8x8xf32>
    %c0_11 = arith.constant 0 : index
    %c0_12 = arith.constant 0 : index
    %13 = vector.load %arg6[%c0_11, %c0_12] : memref<8x8xf32, #tpu.memory_space<vmem>>, vector<8x8xf32>
    tpu.vector_store %arg6[%c0_11, %c0_12], %12 {strides = array<i32>} : memref<8x8xf32, #tpu.memory_space<vmem>>, vector<8x8xf32>,
    return
  }
  func.func @transform_0(%arg0: i32) -> (i32, i32) {
    %c0_i32 = arith.constant 0 : i32
    %c0_i32_0 = arith.constant 0 : i32
    return %arg0, %c0_i32 : i32, i32
  }
  func.func @transform_1(%arg0: i32) -> (i32, i32) {
    %c0_i32 = arith.constant 0 : i32
    %c0_i32_0 = arith.constant 0 : i32
    %c0_i32_1 = arith.constant 0 : i32
    return %c0_i32, %c0_i32_0 : i32, i32
  }
  func.func @transform_2(%arg0: i32) -> (i32, i32) {
    %c0_i32 = arith.constant 0 : i32
    %c0_i32_0 = arith.constant 0 : i32
    %c0_i32_1 = arith.constant 0 : i32
    return %c0_i32, %c0_i32_0 : i32, i32
  }
  func.func @transform_3(%arg0: i32) -> (i32, i32) {
    %c0_i32 = arith.constant 0 : i32
    %c0_i32_0 = arith.constant 0 : i32
    %c0_i32_1 = arith.constant 0 : i32
    return %c0_i32, %c0_i32_0 : i32, i32
  }
  func.func @transform_4(%arg0: i32) -> (i32, i32) {
    %c0_i32 = arith.constant 0 : i32
    %c0_i32_0 = arith.constant 0 : i32
    %c0_i32_1 = arith.constant 0 : i32
    return %c0_i32, %c0_i32_0 : i32, i32
  }
  func.func @transform_5(%arg0: i32) -> (i32, i32) {
    %c0_i32 = arith.constant 0 : i32
    %c0_i32_0 = arith.constant 0 : i32
    return %c0_i32, %arg0 : i32, i32
  }
}

</mosaic_0001>

<llo_original>
// kernel: tpu_custom_call.1
$region0: #{tpu_custom_call.1}
  #allocation0 [shape = 'u32[]', space=smem, size = 0x4, offset = 0x4, fixed_abs, tag = 'smem constant byte address 0x4 - core index']
  #allocation1 [shape = 'u32[144,128]{1,0:T(1,128)}', space=vmem, size = 0x12000, scoped, tag = 'internal scratch']
  %s0 = inlined_call_operand.vmem [shape: f32[8,64], index: 0, kind: input, shape index: {}]
  %s1 = inlined_call_operand.vmem [shape: f32[64,32], index: 1, kind: input, shape index: {}]
  %s2 = inlined_call_operand.vmem [shape: f32[1,32], index: 2, kind: input, shape index: {}]
  %s3 = inlined_call_operand.vmem [shape: f32[8,32], index: 3, kind: input, shape index: {}]
  %s4 = inlined_call_operand.vmem [shape: f32[8,1], index: 4, kind: input, shape index: {}]
  %s5 = inlined_call_operand.hbm [shape: f32[8,8], index: 5, kind: output, shape index: {}]
  %s6 = sld [smem:[#allocation0]]
  $region30: #{tpu_custom_call.1} parent=0
    _
  %s8 = ssub.s32 1, %s6
  %s9 = scalar_select 0, %s8, %s6
  $region1: #{tpu_custom_call.1} parent=0
    #allocation2 [shape = 'u8[4096]{0}', space=vmem, size = 0x1000, scoped, tag = 'output window, operand 0, single buffered']
    #allocation3 [shape = 's32[1]{0}', space=sflag, size = 0x4, scoped, tag = 'scoped memory for tpu_custom_call.1']
    %10 = vsyncpa [#allocation3], 0
    // Predicated region
    $region2: #{tpu_custom_call.1} parent=1 // pred_check
      _
    $region3: #{tpu_custom_call.1} parent=1 // pred_check_branch
      %12 = sbr.rel (0) target = $region5
    $region4: #{tpu_custom_call.1} parent=1 // pred_region
      _
    $region5: #{tpu_custom_call.1} parent=1 // pred_fallthru
      _
    // Predicated region
    $region6: #{tpu_custom_call.1} parent=1 // pred_check
      _
    $region7: #{tpu_custom_call.1} parent=1 // pred_check_branch
      %14 = sbr.rel (0) target = $region9
    $region8: #{tpu_custom_call.1} parent=1 // pred_region
      _
    $region9: #{tpu_custom_call.1} parent=1 // pred_fallthru
      _
    // Predicated region
    $region10: #{tpu_custom_call.1} parent=1 // pred_check
      _
    $region11: #{tpu_custom_call.1} parent=1 // pred_check_branch
      %16 = sbr.rel (0) target = $region13
    $region12: #{tpu_custom_call.1} parent=1 // pred_region
      _
    $region13: #{tpu_custom_call.1} parent=1 // pred_fallthru
      _
    // Predicated region
    $region14: #{tpu_custom_call.1} parent=1 // pred_check
      _
    $region15: #{tpu_custom_call.1} parent=1 // pred_check_branch
      %18 = sbr.rel (0) target = $region17
    $region16: #{tpu_custom_call.1} parent=1 // pred_region
      _
    $region17: #{tpu_custom_call.1} parent=1 // pred_fallthru
      _
    // Predicated region
    $region18: #{tpu_custom_call.1} parent=1 // pred_check
      _
    $region19: #{tpu_custom_call.1} parent=1 // pred_check_branch
      %20 = sbr.rel (0) target = $region21
    $region20: #{tpu_custom_call.1} parent=1 // pred_region
      _
    $region21: #{tpu_custom_call.1} parent=1 // pred_fallthru
      _
    %v21 = vld [vmem:[%s0] sm:$0xff]
    %v22 = vld [vmem:[%s1] sm:$0xff]
    %v23 = vld [vmem:[%s1 + $0x8] sm:$0xff]
    %v24 = vld [vmem:[%s1 + $0x10] sm:$0xff]
    %v25 = vld [vmem:[%s1 + $0x18] sm:$0xff]
    %v26 = vld [vmem:[%s1 + $0x20] sm:$0xff]
    %v27 = vld [vmem:[%s1 + $0x28] sm:$0xff]
    %v28 = vld [vmem:[%s1 + $0x30] sm:$0xff]
    %v29 = vld [vmem:[%s1 + $0x38] sm:$0xff]
    %v30 = vld [vmem:[%s2] sm:$0x1]
    %v32 = vlaneseq
    %v33 = vshrl.u32 %v32, 7
    %v34 = vsub.s32 0, %v33
    %v35 = vrot.slane %v30, %v34
    %vm37 = vcmask 523264
    %v39 = vsel %vm37, %v21, 0
    %41 = vmatprep.subr.mxu0 0.0
    %42 = vmatpush1.msra.mxu0 %v22
    %43 = vmatprep.subr.mxu0 0.0
    %44 = vmatpush1.msra.mxu0 %v23
    %45 = vmatprep.subr.mxu0 0.0
    %46 = vmatpush1.msra.mxu0 %v24
    %47 = vmatprep.subr.mxu0 0.0
    %48 = vmatpush1.msra.mxu0 %v25
    %49 = vmatprep.subr.mxu0 0.0
    %50 = vmatpush1.msra.mxu0 %v26
    %51 = vmatprep.subr.mxu0 0.0
    %52 = vmatpush1.msra.mxu0 %v27
    %53 = vmatprep.subr.mxu0 0.0
    %54 = vmatpush1.msra.mxu0 %v28
    %55 = vmatprep.subr.mxu0 0.0
    %56 = vmatpush1.msra.mxu0 %v29
    %57 = vmatprep.subr.mxu0 0.0
    %58 = vmatpush1.msra.mxu0 0.0
    %59 = vmatprep.subr.mxu0 0.0
    %60 = vmatpush1.msra.mxu0 0.0
    %61 = vmatprep.subr.mxu0 0.0
    %62 = vmatpush1.msra.mxu0 0.0
    %63 = vmatprep.subr.mxu0 0.0
    %64 = vmatpush1.msra.mxu0 0.0
    %65 = vmatprep.subr.mxu0 0.0
    %66 = vmatpush1.msra.mxu0 0.0
    %67 = vmatprep.subr.mxu0 0.0
    %68 = vmatpush1.msra.mxu0 0.0
    %69 = vmatprep.subr.mxu0 0.0
    %70 = vmatpush1.msra.mxu0 0.0
    %71 = vmatprep.subr.mxu0 0.0
    %72 = vmatpush1.msra.mxu0 0.0
    %73 = vmatprep.subr.mxu0 0.0
    %74 = vmatpush1.msra.mxu0 0.0
    %75 = vmatprep.subr.mxu0 0.0
    %76 = vmatpush1.msra.mxu0 0.0
    %77 = vmatprep.subr.mxu0 0.0
    %78 = vmatpush1.msra.mxu0 0.0
    %79 = vmatprep.subr.mxu0 0.0
    %80 = vmatpush1.msra.mxu0 0.0
    %81 = vmatprep.subr.mxu0 0.0
    %82 = vmatpush1.msra.mxu0 0.0
    %83 = vmatprep.subr.mxu0 0.0
    %84 = vmatpush1.msra.mxu0 0.0
    %85 = vmatprep.subr.mxu0 0.0
    %86 = vmatpush1.msra.mxu0 0.0
    %87 = vmatprep.subr.mxu0 0.0
    %88 = vmatpush1.msra.mxu0 0.0
    %89 = vmatprep.subr.mxu0 0.0
    %90 = vmatpush1.msra.mxu0 0.0
    %91 = vmatprep.subr.mxu0 0.0
    %92 = vmatpush1.msra.mxu0 0.0
    %93 = vmatprep.subr.mxu0 0.0
    %94 = vmatpush1.msra.mxu0 0.0
    %95 = vmatprep.subr.mxu0 0.0
    %96 = vmatpush1.msra.mxu0 0.0
    %97 = vmatprep.subr.mxu0 0.0
    %98 = vmatpush1.msra.mxu0 0.0
    %99 = vmatprep.subr.mxu0 0.0
    %100 = vmatpush1.msra.mxu0 0.0
    %101 = vmatprep.subr.mxu0 0.0
    %102 = vmatpush1.msra.mxu0 0.0
    %103 = vmatprep.subr.mxu0 0.0
    %104 = vmatpush1.msra.mxu0 0.0
    %105 = vmatprep.mubr.f32.mxu0 0.0
    %106 = vmatmul.mubr.f32.gmra.mrb[0].mxu0 %v39
    %v107 = vpop.f32.mrb[0].mxu0
    %v108 = vadd.f32 %v35, %v107
    %v109 = vpop.f32.mrb[0].mxu0
    %110 = vdwg.mxu0
    %v111 = vmax.f32 %v108, 0.0
    %v112 = vld [vmem:[%s3] sm:$0xff]
    %v113 = vld [vmem:[%s4] sm:$0xff]
    %115 = vset.pattern.permute.xlu0 0
    %116 = vperm.xlu0 %115, %v113
    %v117 = vpop.permute.xlu0 %116
    %vm119 = vcmask 261120
    %v121 = vsel %vm119, %v112, 0
    %v124 = vsel %vm119, %v111, 0
    %126 = vmatprep.subr.mxu0 0.0
    %127 = vmatpush1.xpose.msra.mxu0 %v124
    %128 = vmatprep.subr.mxu0 0.0
    %129 = vmatpush1.xpose.msra.mxu0 0.0
    %130 = vmatprep.subr.mxu0 0.0
    %131 = vmatpush1.xpose.msra.mxu0 0.0
    %132 = vmatprep.subr.mxu0 0.0
    %133 = vmatpush1.xpose.msra.mxu0 0.0
    %134 = vmatprep.subr.mxu0 0.0
    %135 = vmatpush1.xpose.msra.mxu0 0.0
    %136 = vmatprep.subr.mxu0 0.0
    %137 = vmatpush1.xpose.msra.mxu0 0.0
    %138 = vmatprep.subr.mxu0 0.0
    %139 = vmatpush1.xpose.msra.mxu0 0.0
    %140 = vmatprep.subr.mxu0 0.0
    %141 = vmatpush1.xpose.msra.mxu0 0.0
    %142 = vmatprep.subr.mxu0 0.0
    %143 = vmatpush1.xpose.msra.mxu0 0.0
    %144 = vmatprep.subr.mxu0 0.0
    %145 = vmatpush1.xpose.msra.mxu0 0.0
    %146 = vmatprep.subr.mxu0 0.0
    %147 = vmatpush1.xpose.msra.mxu0 0.0
    %148 = vmatprep.subr.mxu0 0.0
    %149 = vmatpush1.xpose.msra.mxu0 0.0
    %150 = vmatprep.subr.mxu0 0.0
    %151 = vmatpush1.xpose.msra.mxu0 0.0
    %152 = vmatprep.subr.mxu0 0.0
    %153 = vmatpush1.xpose.msra.mxu0 0.0
    %154 = vmatprep.subr.mxu0 0.0
    %155 = vmatpush1.xpose.msra.mxu0 0.0
    %156 = vmatprep.subr.mxu0 0.0
    %157 = vmatpush1.xpose.msra.mxu0 0.0
    %158 = vmatprep.subr.mxu0 0.0
    %159 = vmatpush1.xpose.msra.mxu0 0.0
    %160 = vmatprep.subr.mxu0 0.0
    %161 = vmatpush1.xpose.msra.mxu0 0.0
    %162 = vmatprep.subr.mxu0 0.0
    %163 = vmatpush1.xpose.msra.mxu0 0.0
    %164 = vmatprep.subr.mxu0 0.0
    %165 = vmatpush1.xpose.msra.mxu0 0.0
    %166 = vmatprep.subr.mxu0 0.0
    %167 = vmatpush1.xpose.msra.mxu0 0.0
    %168 = vmatprep.subr.mxu0 0.0
    %169 = vmatpush1.xpose.msra.mxu0 0.0
    %170 = vmatprep.subr.mxu0 0.0
    %171 = vmatpush1.xpose.msra.mxu0 0.0
    %172 = vmatprep.subr.mxu0 0.0
    %173 = vmatpush1.xpose.msra.mxu0 0.0
    %174 = vmatprep.subr.mxu0 0.0
    %175 = vmatpush1.xpose.msra.mxu0 0.0
    %176 = vmatprep.subr.mxu0 0.0
    %177 = vmatpush1.xpose.msra.mxu0 0.0
    %178 = vmatprep.subr.mxu0 0.0
    %179 = vmatpush1.xpose.msra.mxu0 0.0
    %180 = vmatprep.subr.mxu0 0.0
    %181 = vmatpush1.xpose.msra.mxu0 0.0
    %182 = vmatprep.subr.mxu0 0.0
    %183 = vmatpush1.xpose.msra.mxu0 0.0
    %184 = vmatprep.subr.mxu0 0.0
    %185 = vmatpush1.xpose.msra.mxu0 0.0
    %186 = vmatprep.subr.mxu0 0.0
    %187 = vmatpush1.xpose.msra.mxu0 0.0
    %188 = vmatprep.subr.mxu0 0.0
    %189 = vmatpush1.xpose.msra.mxu0 0.0
    %190 = vmatprep.mubr.f32.mxu0 0.0
    %191 = vmatmul.mubr.f32.gmra.mrb[0].mxu0 %v121
    %v192 = vpop.f32.mrb[0].mxu0
    %v193 = vadd.f32 %v117, %v192
    %v194 = vpop.f32.mrb[0].mxu0
    %195 = vdwg.mxu0
    %vm196 = vcmask 64512
    %197 = vst.msk [vmem:[#allocation2] sm:$0xff] %vm196, %v193
    // Predicated region
    $region22: #{tpu_custom_call.1} parent=1 // pred_check
      _
    $region23: #{tpu_custom_call.1} parent=1 // pred_check_branch
      %199 = sbr.rel (0) target = $region25
    $region24: #{tpu_custom_call.1} parent=1 // pred_region
      %s201 = ssub.s32 128, 128
      %202 = vsyncadd [#allocation3], %s201
      %s204 = sshll.u32 [#allocation2], 4
      %s205 = int_to_ptr.vmem [resolvable:$true] %s204
      %207 = dma.vmem_to_hbm [thread:$0]  %s205, 128, %s5, [#allocation3]
    $region25: #{tpu_custom_call.1} parent=1 // pred_fallthru
      _
    // Predicated region
    $region26: #{tpu_custom_call.1} parent=1 // pred_check
      _
    $region27: #{tpu_custom_call.1} parent=1 // pred_check_branch
      %209 = sbr.rel (0) target = $region29
    $region28: #{tpu_custom_call.1} parent=1 // pred_region
      %210 = dma.done [#allocation3], 128
    $region29: #{tpu_custom_call.1} parent=1 // pred_fallthru
      _
    %211 = vsyncpa [#allocation3], 1

</llo_original>
